<compile_context>
chip_gen: v7x
topology: tpu7x:2x2x1
jax: 0.10.0
libtpu: 0.0.40
codegen_flags: <defaults>
</compile_context>

<pallas_src>
import functools

import jax
import jax.numpy as jnp
from jax.experimental import pallas as pl
from jax.experimental.pallas import tpu as pltpu

LANES = 128


def _tpu_tuning():
    """Returns (max_tile_rows, num_cores, vmem_limit_bytes) per TPU generation."""
    kind = ""
    try:
        kind = jax.devices()[0].device_kind.lower()
    except Exception:  # pragma: no cover - defensive; fall back to defaults
        pass
    is_v5e = ("v5 lite" in kind) or ("v5e" in kind) or ("v5litepod" in kind)
    is_v7 = ("v7" in kind) or ("tpu7" in kind)
    if is_v5e:
        # 4096-row f32 double-buffered inputs = 8 MiB; 128 MiB physical VMEM.
        return 4096, 1, 64 * 1024 * 1024
    if is_v7:
        # 2 TensorCores, only 64 MiB VMEM/TC -> explicit 48 MiB limit.
        return 8192, 2, 48 * 1024 * 1024
    # v6e (and other 1-TC, 128 MiB-VMEM chips).
    return 8192, 1, 64 * 1024 * 1024


def _row_multiple(*dtypes):
    """Sublane multiple keeping (rows, 128) blocks legally tiled per dtype."""
    mult = 8
    for dt in dtypes:
        itemsize = jnp.dtype(dt).itemsize
        mult = max(mult, {4: 8, 2: 16, 1: 32}.get(itemsize, 8))
    return mult


def _dice_sums_kernel(x_ref, t_ref, out_ref, *, tile_rows, blocks_per_core,
                      num_blocks, has_dup, n):
    """Accumulates per-(sublane,lane) partials of [s*t, s+t] into out_ref."""
    i = pl.program_id(1)
    blk = pl.program_id(0) * blocks_per_core + i

    # Zero this core's resident accumulator block on its first reduction step.
    @pl.when(i == 0)
    def _():
        out_ref[...] = jnp.zeros_like(out_ref)

    def accumulate(s, t):
        # (tile_rows, 128) -> (tile_rows//8, 8, 128): layout-preserving regroup
        # of vreg tiles; sum over axis 0 is pure elementwise VALU adds.
        st = (s * t).reshape(tile_rows // 8, 8, LANES).sum(axis=0)
        spt = (s + t).reshape(tile_rows // 8, 8, LANES).sum(axis=0)
        out_ref[0, 0, :, :] += st
        out_ref[0, 1, :, :] += spt

    def fast_path():
        accumulate(jax.nn.sigmoid(x_ref[...].astype(jnp.float32)),
                   t_ref[...].astype(jnp.float32))

    has_tail = (n % (tile_rows * LANES)) != 0  # static Python bool

    if has_tail:
        # Interior blocks: mask-free steady state.
        @pl.when(blk < num_blocks - 1)
        def _():
            fast_path()

        # Last real block only: build the tail mask here.  jnp.where (not
        # multiply-by-mask) keeps unspecified/NaN OOB tail contents from
        # poisoning the sums; sigmoid(pad)=0.5 is masked to exactly 0.
        # Duplicated clamped blocks (blk >= num_blocks) skip compute entirely.
        @pl.when(blk == num_blocks - 1)
        def _():
            base = (num_blocks - 1) * (tile_rows * LANES)
            row_ids = jax.lax.broadcasted_iota(jnp.int32, (tile_rows, LANES), 0)
            lane_ids = jax.lax.broadcasted_iota(jnp.int32, (tile_rows, LANES), 1)
            mask = (base + row_ids * LANES + lane_ids) < n
            s = jnp.where(mask, jax.nn.sigmoid(x_ref[...].astype(jnp.float32)), 0.0)
            t = jnp.where(mask, t_ref[...].astype(jnp.float32), 0.0)
            accumulate(s, t)
    elif has_dup:
        # No tail, but the 2-core grid has a duplicated clamped block to skip.
        @pl.when(blk < num_blocks)
        def _():
            fast_path()
    else:
        fast_path()


@functools.partial(jax.jit, static_argnames=("smooth",))
def dice_loss(inputs, targets, smooth=1e-4):
    """Pallas TPU implementation of DiceLoss.forward."""
    x = jnp.reshape(inputs, (-1,))    # keep native dtype; cast to f32 in-kernel
    t = jnp.reshape(targets, (-1,))
    n = x.shape[0]
    if n == 0:
        # All sums are zero -> dice = smooth/smooth = 1 -> loss = 0.
        return jnp.float32(0.0)

    max_tile_rows, num_cores, vmem_limit = _tpu_tuning()

    # Pad to a dtype-legal (rows, 128) shape; padded tail is masked in-kernel.
    row_mult = _row_multiple(x.dtype, t.dtype)
    pad = (-n) % (row_mult * LANES)
    if pad:
        x = jnp.pad(x, (0, pad))
        t = jnp.pad(t, (0, pad))
    rows = (n + pad) // LANES
    x2 = x.reshape(rows, LANES)
    t2 = t.reshape(rows, LANES)

    tile_rows = rows if rows <= max_tile_rows else max_tile_rows
    total_blocks = pl.cdiv(rows, tile_rows)
    num_cores = min(num_cores, total_blocks)          # no empty/duplicate cores
    blocks_per_core = pl.cdiv(total_blocks, num_cores)
    has_dup = num_cores * blocks_per_core > total_blocks

    kernel = functools.partial(
        _dice_sums_kernel, tile_rows=tile_rows, blocks_per_core=blocks_per_core,
        num_blocks=total_blocks, has_dup=has_dup, n=n)

    def in_index_map(c, i):
        # Clamp so DMA never targets a fully out-of-range block; the in-kernel
        # blk check (built from the unclamped id) skips any duplicated block.
        return (jnp.minimum(c * blocks_per_core + i, total_blocks - 1), 0)

    in_spec = pl.BlockSpec((tile_rows, LANES), in_index_map)
    sums = pl.pallas_call(
        kernel,
        out_shape=jax.ShapeDtypeStruct((num_cores, 2, 8, LANES), jnp.float32),
        grid=(num_cores, blocks_per_core),
        in_specs=[in_spec, in_spec],
        out_specs=pl.BlockSpec((1, 2, 8, LANES), lambda c, i: (c, 0, 0, 0)),
        compiler_params=pltpu.CompilerParams(
            dimension_semantics=("parallel", "arbitrary"),
            vmem_limit_bytes=vmem_limit),
    )(x2, t2)

    totals = jnp.sum(sums, axis=(0, 2, 3))   # (2,): [sum(s*t), sum(s)+sum(t)]
    intersection, denom = totals[0], totals[1]
    dice = (2.0 * intersection + smooth) / (denom + smooth)
    return 1.0 - dice


def _dice_loss_ref(inputs, targets, smooth=1e-4):
    s = jax.nn.sigmoid(inputs.reshape(-1).astype(jnp.float32))
    t = targets.reshape(-1).astype(jnp.float32)
    inter = jnp.sum(s * t)
    dice = (2.0 * inter + smooth) / (jnp.sum(s) + jnp.sum(t) + smooth)
    return 1.0 - dice


if __name__ == "__main__":
    key = jax.random.PRNGKey(0)
    k1, k2 = jax.random.split(key)
    # NCHW, small shapes: batch=2, channels=4, spatial=16x16
    x = jax.random.normal(k1, (2, 4, 16, 16), dtype=jnp.float32)
    tgt = (jax.random.uniform(k2, (2, 4, 16, 16)) > 0.5).astype(jnp.float32)

    loss = dice_loss(x, tgt)
    loss = jax.block_until_ready(loss)

    ref = _dice_loss_ref(x, tgt)
    assert jnp.allclose(loss, ref, atol=1e-5, rtol=1e-5), (loss, ref)
    print("KERNEL_OK")
</pallas_src>

<mosaic_0001>
module attributes {stable_mosaic.version = 11 : i64} {
  func.func @_dice_sums_kernel(%arg0: i32, %arg1: i32, %arg2: memref<16x128xf32, #tpu.memory_space<vmem>>, %arg3: memref<16x128xf32, #tpu.memory_space<vmem>>, %arg4: memref<1x2x8x128xf32, #tpu.memory_space<vmem>>) attributes {dimension_semantics = [#tpu.dimension_semantics<parallel>, #tpu.dimension_semantics<arbitrary>], iteration_bounds = array<i64: 1, 1>, scalar_prefetch = 0 : i64, scratch_operands = 0 : i64, tpu.core_type = #tpu.core_type<tc>, window_params = [{transform_indices = @transform_0, window_bounds = array<i64: 16, 128>}, {transform_indices = @transform_1, window_bounds = array<i64: 16, 128>}, {transform_indices = @transform_2, window_bounds = array<i64: 1, 2, 8, 128>}]} {
    %c0_i32 = arith.constant 0 : i32
    %0 = arith.cmpi eq, %arg1, %c0_i32 : i32
    %1 = arith.extui %0 : i1 to i32
    %c0_i32_0 = arith.constant 0 : i32
    %2 = arith.cmpi ne, %1, %c0_i32_0 : i32
    scf.if %2 {
      %cst_21 = arith.constant 0.000000e+00 : f32
      %28 = vector.broadcast %cst_21 : f32 to vector<1x2x8x128xf32>
      %c0_22 = arith.constant 0 : index
      %c0_23 = arith.constant 0 : index
      %c0_24 = arith.constant 0 : index
      %c0_25 = arith.constant 0 : index
      %29 = vector.load %arg4[%c0_22, %c0_23, %c0_24, %c0_25] : memref<1x2x8x128xf32, #tpu.memory_space<vmem>>, vector<1x2x8x128xf32>
      tpu.vector_store %arg4[%c0_22, %c0_23, %c0_24, %c0_25], %28 {strides = array<i32>} : memref<1x2x8x128xf32, #tpu.memory_space<vmem>>, vector<1x2x8x128xf32>,
    } else {
    }
    %c0 = arith.constant 0 : index
    %c0_1 = arith.constant 0 : index
    %3 = vector.load %arg2[%c0, %c0_1] : memref<16x128xf32, #tpu.memory_space<vmem>>, vector<16x128xf32>
    %4 = arith.negf %3 : vector<16x128xf32>
    %5 = math.exp %4 : vector<16x128xf32>
    %cst = arith.constant 1.000000e+00 : f32
    %6 = vector.broadcast %cst : f32 to vector<16x128xf32>
    %7 = arith.addf %6, %5 : vector<16x128xf32>
    %8 = arith.divf %6, %7 : vector<16x128xf32>
    %c0_2 = arith.constant 0 : index
    %c0_3 = arith.constant 0 : index
    %9 = vector.load %arg3[%c0_2, %c0_3] : memref<16x128xf32, #tpu.memory_space<vmem>>, vector<16x128xf32>
    %10 = arith.mulf %8, %9 : vector<16x128xf32>
    %11 = vector.shape_cast %10 : vector<16x128xf32> to vector<2x8x128xf32>
    %cst_4 = arith.constant dense<0.000000e+00> : vector<8x128xf32>
    %12 = vector.multi_reduction <add>, %11, %cst_4 [0] : vector<2x8x128xf32> to vector<8x128xf32>
    %13 = arith.addf %8, %9 : vector<16x128xf32>
    %14 = vector.shape_cast %13 : vector<16x128xf32> to vector<2x8x128xf32>
    %cst_5 = arith.constant dense<0.000000e+00> : vector<8x128xf32>
    %15 = vector.multi_reduction <add>, %14, %cst_5 [0] : vector<2x8x128xf32> to vector<8x128xf32>
    %c0_6 = arith.constant 0 : index
    %c0_7 = arith.constant 0 : index
    %c0_8 = arith.constant 0 : index
    %c0_9 = arith.constant 0 : index
    %16 = vector.load %arg4[%c0_6, %c0_7, %c0_8, %c0_9] : memref<1x2x8x128xf32, #tpu.memory_space<vmem>>, vector<1x1x8x128xf32>
    %17 = vector.shape_cast %16 : vector<1x1x8x128xf32> to vector<8x128xf32>
    %18 = arith.addf %17, %12 : vector<8x128xf32>
    %c0_10 = arith.constant 0 : index
    %c0_11 = arith.constant 0 : index
    %c0_12 = arith.constant 0 : index
    %c0_13 = arith.constant 0 : index
    %19 = vector.load %arg4[%c0_10, %c0_11, %c0_12, %c0_13] : memref<1x2x8x128xf32, #tpu.memory_space<vmem>>, vector<1x1x8x128xf32>
    %20 = vector.shape_cast %19 : vector<1x1x8x128xf32> to vector<8x128xf32>
    %21 = vector.shape_cast %18 : vector<8x128xf32> to vector<1x1x8x128xf32>
    tpu.vector_store %arg4[%c0_10, %c0_11, %c0_12, %c0_13], %21 {strides = array<i32>} : memref<1x2x8x128xf32, #tpu.memory_space<vmem>>, vector<1x1x8x128xf32>,
    %c0_14 = arith.constant 0 : index
    %c1 = arith.constant 1 : index
    %c0_15 = arith.constant 0 : index
    %c0_16 = arith.constant 0 : index
    %22 = vector.load %arg4[%c0_14, %c1, %c0_15, %c0_16] : memref<1x2x8x128xf32, #tpu.memory_space<vmem>>, vector<1x1x8x128xf32>
    %23 = vector.shape_cast %22 : vector<1x1x8x128xf32> to vector<8x128xf32>
    %24 = arith.addf %23, %15 : vector<8x128xf32>
    %c0_17 = arith.constant 0 : index
    %c1_18 = arith.constant 1 : index
    %c0_19 = arith.constant 0 : index
    %c0_20 = arith.constant 0 : index
    %25 = vector.load %arg4[%c0_17, %c1_18, %c0_19, %c0_20] : memref<1x2x8x128xf32, #tpu.memory_space<vmem>>, vector<1x1x8x128xf32>
    %26 = vector.shape_cast %25 : vector<1x1x8x128xf32> to vector<8x128xf32>
    %27 = vector.shape_cast %24 : vector<8x128xf32> to vector<1x1x8x128xf32>
    tpu.vector_store %arg4[%c0_17, %c1_18, %c0_19, %c0_20], %27 {strides = array<i32>} : memref<1x2x8x128xf32, #tpu.memory_space<vmem>>, vector<1x1x8x128xf32>,
    return
  }
  func.func @transform_0(%arg0: i32, %arg1: i32) -> (i32, i32) {
    %c1_i32 = arith.constant 1 : i32
    %0 = arith.muli %arg0, %c1_i32 : i32
    %1 = arith.addi %0, %arg1 : i32
    %c0_i32 = arith.constant 0 : i32
    %2 = arith.minsi %1, %c0_i32 : i32
    %c0_i32_0 = arith.constant 0 : i32
    %c0_i32_1 = arith.constant 0 : i32
    return %2, %c0_i32_0 : i32, i32
  }
  func.func @transform_1(%arg0: i32, %arg1: i32) -> (i32, i32) {
    %c1_i32 = arith.constant 1 : i32
    %0 = arith.muli %arg0, %c1_i32 : i32
    %1 = arith.addi %0, %arg1 : i32
    %c0_i32 = arith.constant 0 : i32
    %2 = arith.minsi %1, %c0_i32 : i32
    %c0_i32_0 = arith.constant 0 : i32
    %c0_i32_1 = arith.constant 0 : i32
    return %2, %c0_i32_0 : i32, i32
  }
  func.func @transform_2(%arg0: i32, %arg1: i32) -> (i32, i32, i32, i32) {
    %c0_i32 = arith.constant 0 : i32
    %c0_i32_0 = arith.constant 0 : i32
    %c0_i32_1 = arith.constant 0 : i32
    %c0_i32_2 = arith.constant 0 : i32
    return %arg0, %c0_i32, %c0_i32_0, %c0_i32_1 : i32, i32, i32, i32
  }
}

</mosaic_0001>

<llo_original>
// kernel: dice_loss.1
$region0: #{dice_loss.1}
  #allocation0 [shape = 'u32[]', space=smem, size = 0x4, offset = 0x4, fixed_abs, tag = 'smem constant byte address 0x4 - core index']
  #allocation1 [shape = 'u32[144,128]{1,0:T(1,128)}', space=vmem, size = 0x12000, scoped, tag = 'internal scratch']
  %s0 = inlined_call_operand.hbm [shape: f32[16,128], index: 0, kind: input, shape index: {}]
  %s1 = inlined_call_operand.hbm [shape: f32[16,128], index: 1, kind: input, shape index: {}]
  %s2 = inlined_call_operand.hbm [shape: f32[1,2,8,128], index: 2, kind: output, shape index: {}]
  %s3 = sld [smem:[#allocation0]]
  $region30: #{dice_loss.1} parent=0
    _
  %s5 = ssub.s32 1, %s3
  %s6 = scalar_select 0, %s5, %s3
  $region1: #{dice_loss.1} parent=0
    #allocation2 [shape = 'u8[8192]{0}', space=vmem, size = 0x2000, scoped, tag = 'input window, operand 0, single buffered']
    #allocation3 [shape = 's32[1]{0}', space=sflag, size = 0x4, scoped, tag = 'scoped memory for dice_loss.1']
    #allocation4 [shape = 's32[1]{0}', space=sflag, size = 0x4, scoped, tag = 'scoped memory for dice_loss.1']
    #allocation5 [shape = 'u8[8192]{0}', space=vmem, size = 0x2000, scoped, tag = 'input window, operand 1, single buffered']
    #allocation6 [shape = 's32[1]{0}', space=sflag, size = 0x4, scoped, tag = 'scoped memory for dice_loss.1']
    #allocation7 [shape = 'u8[8192]{0}', space=vmem, size = 0x2000, scoped, tag = 'output window, operand 0, single buffered']
    %7 = vsyncpa [#allocation3], 0
    %8 = vsyncpa [#allocation6], 0
    %9 = vsyncpa [#allocation4], 0
    // Predicated region
    $region2: #{dice_loss.1} parent=1 // pred_check
      _
    $region3: #{dice_loss.1} parent=1 // pred_check_branch
      %11 = sbr.rel (0) target = $region5
    $region4: #{dice_loss.1} parent=1 // pred_region
      %s12 = sadd.s32 0, 0
      %p13 = scmp.lt.s32.totalorder %s12, 0
      %s14 = scalar_select %p13, %s12, 0
      %s15 = smul.u32 2, %s14
      %s17 = ssub.s32 256, 256
      %18 = vsyncadd [#allocation3], %s17
      %s19 = smul.addr %s15, 128
      %s20 = scalar_lea.hbm %s0, %s19
      %s21 = sshll.u32 [#allocation2], 4
      %s22 = int_to_ptr.vmem [resolvable:$true] %s21
      %27 = dma.hbm_to_vmem [thread:$0]  %s20, 256, %s22, [#allocation3], 128, 128, 8
    $region5: #{dice_loss.1} parent=1 // pred_fallthru
      _
    // Predicated region
    $region6: #{dice_loss.1} parent=1 // pred_check
      _
    $region7: #{dice_loss.1} parent=1 // pred_check_branch
      %29 = sbr.rel (0) target = $region9
    $region8: #{dice_loss.1} parent=1 // pred_region
      %s30 = sadd.s32 0, 0
      %p31 = scmp.lt.s32.totalorder %s30, 0
      %s32 = scalar_select %p31, %s30, 0
      %s33 = smul.u32 2, %s32
      %s35 = ssub.s32 256, 256
      %36 = vsyncadd [#allocation6], %s35
      %s37 = smul.addr %s33, 128
      %s38 = scalar_lea.hbm %s1, %s37
      %s39 = sshll.u32 [#allocation5], 4
      %s40 = int_to_ptr.vmem [resolvable:$true] %s39
      %45 = dma.hbm_to_vmem [thread:$0]  %s38, 256, %s40, [#allocation6], 128, 128, 8
    $region9: #{dice_loss.1} parent=1 // pred_fallthru
      _
    // Predicated region
    $region10: #{dice_loss.1} parent=1 // pred_check
      _
    $region11: #{dice_loss.1} parent=1 // pred_check_branch
      %47 = sbr.rel (0) target = $region13
    $region12: #{dice_loss.1} parent=1 // pred_region
      %48 = dma.done [#allocation3], 256
    $region13: #{dice_loss.1} parent=1 // pred_fallthru
      _
    // Predicated region
    $region14: #{dice_loss.1} parent=1 // pred_check
      _
    $region15: #{dice_loss.1} parent=1 // pred_check_branch
      %50 = sbr.rel (0) target = $region17
    $region16: #{dice_loss.1} parent=1 // pred_region
      %51 = dma.done [#allocation6], 256
    $region17: #{dice_loss.1} parent=1 // pred_fallthru
      _
    %s52 = sadd.s32 0, 0
    %p53 = scmp.lt.s32.totalorder %s52, 0
    %s54 = scalar_select %p53, %s52, 0
    %s55 = smul.u32 2, %s54
    %s56 = sadd.s32 0, 0
    %p57 = scmp.lt.s32.totalorder %s56, 0
    %s58 = scalar_select %p57, %s56, 0
    %s59 = smul.u32 2, %s58
    %p60 = scmp.eq.s32.totalorder 0, 0
    // Predicated region
    $region18: #{dice_loss.1} parent=1 // pred_check
      %p61 = pneg %p60
    $region19: #{dice_loss.1} parent=1 // pred_check_branch
      %63 = sbr.rel (%p61) target = $region21
    $region20: #{dice_loss.1} parent=1 // pred_region
      %64 = vst [vmem:[#allocation7] sm:$0xff] 0.0
      %65 = vst [vmem:[#allocation7 + $0x8] sm:$0xff] 0.0
    $region21: #{dice_loss.1} parent=1 // pred_fallthru
      _
    %v66 = vld [vmem:[#allocation2] sm:$0xff]
    %v67 = vld [vmem:[#allocation2 + $0x8] sm:$0xff]
    %v68 = vxor.u32 %v66, 2147483648
    %v69 = vxor.u32 %v67, 2147483648
    %v70 = vmul.f32 %v68, 1.442695
    %v71 = vpow.pop %v70
    %v72 = vmul.f32 %v69, 1.442695
    %v73 = vpow.pop %v72
    %v74 = vadd.f32 %v71, 1.0
    %v75 = vadd.f32 %v73, 1.0
    %v76 = vrcp.pop %v74
    %v77 = vmul.f32 1.0, %v76
    %v78 = vrcp.pop %v75
    %v79 = vmul.f32 1.0, %v78
    %v80 = vld [vmem:[#allocation5] sm:$0xff]
    %v81 = vld [vmem:[#allocation5 + $0x8] sm:$0xff]
    %v82 = vmul.f32 %v77, %v80
    %v83 = vmul.f32 %v79, %v81
    %v84 = vadd.f32 %v82, %v83
    %v85 = vadd.f32 %v77, %v80
    %v86 = vadd.f32 %v79, %v81
    %v87 = vadd.f32 %v85, %v86
    %v88 = vld [vmem:[#allocation7] sm:$0xff]
    %v89 = vadd.f32 %v88, %v84
    %90 = vst [vmem:[#allocation7] sm:$0xff] %v89
    %s91 = scalar_lea.vmem [#allocation7], 8
    %v92 = vld [vmem:[%s91] sm:$0xff]
    %v93 = vadd.f32 %v92, %v87
    %94 = vst [vmem:[%s91] sm:$0xff] %v93
    // Predicated region
    $region22: #{dice_loss.1} parent=1 // pred_check
      _
    $region23: #{dice_loss.1} parent=1 // pred_check_branch
      %96 = sbr.rel (0) target = $region25
    $region24: #{dice_loss.1} parent=1 // pred_region
      %s98 = ssub.s32 256, 256
      %99 = vsyncadd [#allocation4], %s98
      %s100 = sshll.u32 [#allocation7], 4
      %s101 = int_to_ptr.vmem [resolvable:$true] %s100
      %106 = dma.vmem_to_hbm [thread:$0]  %s101, 256, %s2, [#allocation4], 128, 128, 8
    $region25: #{dice_loss.1} parent=1 // pred_fallthru
      _
    // Predicated region
    $region26: #{dice_loss.1} parent=1 // pred_check
      _
    $region27: #{dice_loss.1} parent=1 // pred_check_branch
      %108 = sbr.rel (0) target = $region29
    $region28: #{dice_loss.1} parent=1 // pred_region
      %109 = dma.done [#allocation4], 256
    $region29: #{dice_loss.1} parent=1 // pred_fallthru
      _
    %110 = vsyncpa [#allocation3], 1
    %111 = vsyncpa [#allocation6], 1
    %112 = vsyncpa [#allocation4], 1

</llo_original>
